<compile_context>
chip_gen: v7x
topology: tpu7x:2x2x1
jax: 0.10.0
libtpu: 0.0.40
codegen_flags: <defaults>
</compile_context>

<pallas_src>
import jax
import jax.numpy as jnp
from jax import lax
from jax.experimental import pallas as pl
from jax.experimental.pallas import tpu as pltpu


# ---------------- Pallas kernel 1: fc + bn2(eval) + relu, K-tiled reduction ----------
def fc_bn_relu_kernel(x_ref, wt_ref, b_ref, scale_ref, shift_ref, out_ref, acc_ref):
    # x: (B, tk)   wt: (tk, D)   b/scale/shift: (1, D)   out: (B, D)   acc: (B, D) f32
    k = pl.program_id(0)

    @pl.when(k == 0)
    def _():
        acc_ref[...] = jnp.zeros_like(acc_ref)

    acc_ref[...] += lax.dot_general(
        x_ref[...], wt_ref[...],
        dimension_numbers=(((1,), (0,)), ((), ())),      # canonical (B,tk) @ (tk,D)
        preferred_element_type=jnp.float32)

    @pl.when(k == pl.num_programs(0) - 1)
    def _():
        h = acc_ref[...] + b_ref[...]
        h = h * scale_ref[...] + shift_ref[...]          # BatchNorm1d (eval), pre-folded
        out_ref[...] = jnp.maximum(h, 0.0)


# ---------------- Pallas kernel 2: sigmoid(h @ E^T + b), bf16-streamed table ---------
def score_kernel(h_ref, et_ref, b_ref, out_ref):
    # h: (B, D) bf16 resident   et: (D, TN) bf16 streamed tile   b: (1, TN)   out: (B, TN)
    s = lax.dot_general(
        h_ref[...], et_ref[...],
        dimension_numbers=(((1,), (0,)), ((), ())),      # canonical, no in-kernel transpose
        preferred_element_type=jnp.float32)
    s = s + b_ref[...]                                   # per-entity bias
    out_ref[...] = 1.0 / (1.0 + jnp.exp(-s))             # exact sigmoid (exp on EUP slot)


# --------------------------------- helpers ------------------------------------------
def _bn_fold(gamma, beta, mean, var, eps=1e-5):
    """Fold BatchNorm (eval mode) into a per-channel scale & shift."""
    scale = gamma * lax.rsqrt(var + eps)
    shift = beta - mean * scale
    return scale, shift


# --------------------------------- forward ------------------------------------------
def conve_forward(e1, rel, params, *, tile_n=1024, tile_k=1152):
    emb_e = params["emb_e"]
    emb_rel = params["emb_rel"]
    B = e1.shape[0]
    N, D = emb_e.shape
    assert D == 200, "ConvE hard-codes the (10, 20) reshape and fc(10368, D)"

    # ---- glue: embedding gather + stack (dropouts are identity in eval mode) -------
    e1 = e1.reshape(-1)
    rel = rel.reshape(-1)
    e1_emb = emb_e[e1].reshape(B, 1, 10, 20)
    rel_emb = emb_rel[rel].reshape(B, 1, 10, 20)
    x = jnp.concatenate([e1_emb, rel_emb], axis=2)                       # (B,1,20,20)

    s0, t0 = _bn_fold(*params["bn0"])
    x = x * s0.reshape(1, 1, 1, 1) + t0.reshape(1, 1, 1, 1)              # bn0 (eval)

    # TODO(synk): the tiny 3x3 conv + bn1 + relu stay as plain-JAX glue; the two
    # heavy matmuls (fc projection and the entity-table scoring) are Pallas kernels.
    x = lax.conv_general_dilated(
        x, params["conv_w"], window_strides=(1, 1), padding="VALID",
        dimension_numbers=("NCHW", "OIHW", "NCHW"))                      # (B,32,18,18)
    x = x + params["conv_b"].reshape(1, -1, 1, 1)
    s1, t1 = _bn_fold(*params["bn1"])
    x = jnp.maximum(x * s1.reshape(1, -1, 1, 1) + t1.reshape(1, -1, 1, 1), 0.0)
    x = x.reshape(B, -1)                                                 # (B, 10368)
    K = x.shape[1]
    assert K % tile_k == 0, "tile_k must divide 10368 (use a 128*{1,3,9,27,81} divisor)"

    s2, t2 = _bn_fold(*params["bn2"])
    fc_wt = params["fc_w"].T                                             # (K, D), one-time
    fc_b = params["fc_b"]                                                # (D,)

    # ---- Pallas kernel 1: fc + bn2 + relu, grid over the K reduction ---------------
    h = pl.pallas_call(
        fc_bn_relu_kernel,
        out_shape=jax.ShapeDtypeStruct((B, D), jnp.float32),
        grid_spec=pltpu.PrefetchScalarGridSpec(
            num_scalar_prefetch=0,
            grid=(K // tile_k,),
            in_specs=[pl.BlockSpec((B, tile_k), lambda k: (0, k)),       # activations
                      pl.BlockSpec((tile_k, D), lambda k: (k, 0)),       # streamed weights
                      pl.BlockSpec((1, D), lambda k: (0, 0)),
                      pl.BlockSpec((1, D), lambda k: (0, 0)),
                      pl.BlockSpec((1, D), lambda k: (0, 0))],
            out_specs=pl.BlockSpec((B, D), lambda k: (0, 0)),            # resident output
            scratch_shapes=[pltpu.VMEM((B, D), jnp.float32)],
        ),
        compiler_params=pltpu.CompilerParams(
            dimension_semantics=("arbitrary",),                          # reduction axis
            vmem_limit_bytes=24 * 1024 * 1024),
    )(x, fc_wt, fc_b.reshape(1, D), s2.reshape(1, D), t2.reshape(1, D))

    # ---- Pallas kernel 2: scores = sigmoid(h @ emb_e^T + b), tiled over entities ---
    # Entity table pre-transposed once to (D, N) and streamed in bf16 (f32 accumulate):
    # halves HBM traffic of the memory-bound kernel, lane-dense in tile_n, D=200 on
    # sublanes (no 200->256 lane padding), canonical MXU (K, N) weight orientation.
    n_pad = pl.cdiv(N, tile_n) * tile_n
    emb_t = emb_e.T.astype(jnp.bfloat16)                                 # (D, N), one-time
    b_ent = params["b"]
    if n_pad != N:
        # Zero-padded columns score sigmoid(0) = 0.5 and are sliced off below.
        emb_t = jnp.pad(emb_t, ((0, 0), (0, n_pad - N)))
        b_ent = jnp.pad(b_ent, (0, n_pad - N))
    b_row = b_ent.reshape(1, n_pad)
    h_bf = h.astype(jnp.bfloat16)                                        # tiny (B, D)

    pred = pl.pallas_call(
        score_kernel,
        out_shape=jax.ShapeDtypeStruct((B, n_pad), jnp.float32),
        grid_spec=pltpu.PrefetchScalarGridSpec(
            num_scalar_prefetch=0,
            grid=(n_pad // tile_n,),
            in_specs=[pl.BlockSpec((B, D), lambda j: (0, 0)),            # resident queries
                      pl.BlockSpec((D, tile_n), lambda j: (0, j)),       # streamed bf16 table
                      pl.BlockSpec((1, tile_n), lambda j: (0, j))],      # bias tile
            out_specs=pl.BlockSpec((B, tile_n), lambda j: (0, j)),       # lane-dense store
        ),
        compiler_params=pltpu.CompilerParams(
            # "parallel" lets the entity axis shard across v7x's 2 TensorCores
            # (keep >= 2 tiles per call); no-op on single-TC v5e/v6e.
            dimension_semantics=("parallel",),
            vmem_limit_bytes=8 * 1024 * 1024),
    )(h_bf, emb_t, b_row)

    return pred[:, :N]


# --------------------------------- reference -----------------------------------------
def conve_forward_ref(e1, rel, params):
    emb_e = params["emb_e"]
    emb_rel = params["emb_rel"]
    B = e1.shape[0]
    e1 = e1.reshape(-1)
    rel = rel.reshape(-1)
    x = jnp.concatenate([emb_e[e1].reshape(B, 1, 10, 20),
                         emb_rel[rel].reshape(B, 1, 10, 20)], axis=2)
    s0, t0 = _bn_fold(*params["bn0"])
    x = x * s0.reshape(1, 1, 1, 1) + t0.reshape(1, 1, 1, 1)
    x = lax.conv_general_dilated(
        x, params["conv_w"], (1, 1), "VALID",
        dimension_numbers=("NCHW", "OIHW", "NCHW"))
    x = x + params["conv_b"].reshape(1, -1, 1, 1)
    s1, t1 = _bn_fold(*params["bn1"])
    x = jnp.maximum(x * s1.reshape(1, -1, 1, 1) + t1.reshape(1, -1, 1, 1), 0.0)
    x = x.reshape(B, -1)
    h = jnp.dot(x, params["fc_w"].T, precision=lax.Precision.HIGHEST) + params["fc_b"]
    s2, t2 = _bn_fold(*params["bn2"])
    h = jnp.maximum(h * s2 + t2, 0.0)
    s = jnp.dot(h, emb_e.T, precision=lax.Precision.HIGHEST) + params["b"]
    return 1.0 / (1.0 + jnp.exp(-s))


# ----------------------------------- main ---------------------------------------------
if __name__ == "__main__":
    # Small config: batch=16, embedding_dim=200 (fixed by the 10x20 reshape / fc 10368),
    # num_entities=2000 (exercises tile padding + a 2-tile entity grid), num_relations=64.
    B, D, N_ENT, N_REL, TILE_N, TILE_K = 16, 200, 2000, 64, 1024, 1152

    key = jax.random.PRNGKey(0)
    ks = jax.random.split(key, 16)

    def xavier(k, shape):
        std = (2.0 / (shape[0] + shape[1])) ** 0.5
        return jax.random.normal(k, shape, jnp.float32) * std

    def bn_init(k, c):
        k1, k2, k3, k4 = jax.random.split(k, 4)
        gamma = 1.0 + 0.1 * jax.random.normal(k1, (c,), jnp.float32)
        beta = 0.1 * jax.random.normal(k2, (c,), jnp.float32)
        mean = 0.1 * jax.random.normal(k3, (c,), jnp.float32)
        var = 1.0 + 0.1 * jnp.abs(jax.random.normal(k4, (c,), jnp.float32))
        return gamma, beta, mean, var

    # padding_idx=0 -> row 0 of each embedding table is zero.
    emb_e = xavier(ks[0], (N_ENT, D)).at[0].set(0.0)
    emb_rel = xavier(ks[1], (N_REL, D)).at[0].set(0.0)
    conv_w = jax.random.normal(ks[2], (32, 1, 3, 3), jnp.float32) * 0.2
    conv_b = jax.random.normal(ks[3], (32,), jnp.float32) * 0.1
    fc_w = jax.random.normal(ks[4], (D, 10368), jnp.float32) * (2.0 / 10368 ** 0.5)
    fc_b = jax.random.normal(ks[5], (D,), jnp.float32) * 0.1
    b_ent = jax.random.normal(ks[6], (N_ENT,), jnp.float32) * 0.5

    params = dict(
        emb_e=emb_e, emb_rel=emb_rel,
        conv_w=conv_w, conv_b=conv_b,
        fc_w=fc_w, fc_b=fc_b, b=b_ent,
        bn0=bn_init(ks[7], 1), bn1=bn_init(ks[8], 32), bn2=bn_init(ks[9], D),
    )

    e1 = jax.random.randint(ks[10], (B, 1), 0, N_ENT, dtype=jnp.int32)
    rel = jax.random.randint(ks[11], (B, 1), 0, N_REL, dtype=jnp.int32)

    pred = conve_forward(e1, rel, params, tile_n=TILE_N, tile_k=TILE_K)
    pred = jax.block_until_ready(pred)

    ref = conve_forward_ref(e1, rel, params)
    assert pred.shape == (B, N_ENT)
    max_err = float(jnp.max(jnp.abs(pred - ref)))
    # Tolerance covers bf16 streaming of the entity table / queries (f32 accumulation)
    # vs. the float32 HIGHEST-precision reference.
    assert jnp.allclose(pred, ref, atol=3e-3, rtol=3e-3), f"max abs err {max_err}"

    print("KERNEL_OK")
</pallas_src>

<mosaic_0001>
module attributes {stable_mosaic.version = 11 : i64} {
  func.func @fc_bn_relu_kernel(%arg0: i32, %arg1: memref<16x1152xf32, #tpu.memory_space<vmem>>, %arg2: memref<1152x200xf32, #tpu.memory_space<vmem>>, %arg3: memref<1x200xf32, #tpu.memory_space<vmem>>, %arg4: memref<1x200xf32, #tpu.memory_space<vmem>>, %arg5: memref<1x200xf32, #tpu.memory_space<vmem>>, %arg6: memref<16x200xf32, #tpu.memory_space<vmem>>, %arg7: memref<16x200xf32, #tpu.memory_space<vmem>>) attributes {dimension_semantics = [#tpu.dimension_semantics<arbitrary>], iteration_bounds = array<i64: 9>, scalar_prefetch = 0 : i64, scratch_operands = 1 : i64, tpu.core_type = #tpu.core_type<tc>, window_params = [{transform_indices = @transform_0, window_bounds = array<i64: 16, 1152>}, {transform_indices = @transform_1, window_bounds = array<i64: 1152, 200>}, {pipeline_mode = #tpu.pipeline_mode<synchronous>, transform_indices = @transform_2, window_bounds = array<i64: 1, 200>}, {pipeline_mode = #tpu.pipeline_mode<synchronous>, transform_indices = @transform_3, window_bounds = array<i64: 1, 200>}, {pipeline_mode = #tpu.pipeline_mode<synchronous>, transform_indices = @transform_4, window_bounds = array<i64: 1, 200>}, {pipeline_mode = #tpu.pipeline_mode<synchronous>, transform_indices = @transform_5, window_bounds = array<i64: 16, 200>}]} {
    %c0_i32 = arith.constant 0 : i32
    %0 = arith.cmpi eq, %arg0, %c0_i32 : i32
    %1 = arith.extui %0 : i1 to i32
    %c0_i32_0 = arith.constant 0 : i32
    %2 = arith.cmpi ne, %1, %c0_i32_0 : i32
    scf.if %2 {
      %cst_9 = arith.constant 0.000000e+00 : f32
      %12 = vector.broadcast %cst_9 : f32 to vector<16x200xf32>
      %c0_10 = arith.constant 0 : index
      %c0_11 = arith.constant 0 : index
      %13 = vector.load %arg7[%c0_10, %c0_11] : memref<16x200xf32, #tpu.memory_space<vmem>>, vector<16x200xf32>
      tpu.vector_store %arg7[%c0_10, %c0_11], %12 {strides = array<i32>} : memref<16x200xf32, #tpu.memory_space<vmem>>, vector<16x200xf32>,
    } else {
    }
    %c0 = arith.constant 0 : index
    %c0_1 = arith.constant 0 : index
    %3 = vector.load %arg7[%c0, %c0_1] : memref<16x200xf32, #tpu.memory_space<vmem>>, vector<16x200xf32>
    %c0_2 = arith.constant 0 : index
    %c0_3 = arith.constant 0 : index
    %4 = vector.load %arg1[%c0_2, %c0_3] : memref<16x1152xf32, #tpu.memory_space<vmem>>, vector<16x1152xf32>
    %c0_4 = arith.constant 0 : index
    %c0_5 = arith.constant 0 : index
    %5 = vector.load %arg2[%c0_4, %c0_5] : memref<1152x200xf32, #tpu.memory_space<vmem>>, vector<1152x200xf32>
    %cst = arith.constant dense<0.000000e+00> : vector<16x200xf32>
    %6 = tpu.matmul %4, %5, %cst {dimension_numbers = #tpu.dot_dimension_numbers<[1], [0], [0], [1], [0, 0, 1, 1], [], []>} : vector<16x1152xf32>, vector<1152x200xf32>, vector<16x200xf32> -> vector<16x200xf32>
    %7 = arith.addf %3, %6 : vector<16x200xf32>
    %c0_6 = arith.constant 0 : index
    %c0_7 = arith.constant 0 : index
    %8 = vector.load %arg7[%c0_6, %c0_7] : memref<16x200xf32, #tpu.memory_space<vmem>>, vector<16x200xf32>
    tpu.vector_store %arg7[%c0_6, %c0_7], %7 {strides = array<i32>} : memref<16x200xf32, #tpu.memory_space<vmem>>, vector<16x200xf32>,
    %c8_i32 = arith.constant 8 : i32
    %9 = arith.cmpi eq, %arg0, %c8_i32 : i32
    %10 = arith.extui %9 : i1 to i32
    %c0_i32_8 = arith.constant 0 : i32
    %11 = arith.cmpi ne, %10, %c0_i32_8 : i32
    scf.if %11 {
      %c0_9 = arith.constant 0 : index
      %c0_10 = arith.constant 0 : index
      %12 = vector.load %arg7[%c0_9, %c0_10] : memref<16x200xf32, #tpu.memory_space<vmem>>, vector<16x200xf32>
      %c0_11 = arith.constant 0 : index
      %c0_12 = arith.constant 0 : index
      %13 = vector.load %arg3[%c0_11, %c0_12] : memref<1x200xf32, #tpu.memory_space<vmem>>, vector<1x200xf32>
      %14 = vector.broadcast %13 : vector<1x200xf32> to vector<16x200xf32>
      %15 = arith.addf %12, %14 : vector<16x200xf32>
      %c0_13 = arith.constant 0 : index
      %c0_14 = arith.constant 0 : index
      %16 = vector.load %arg4[%c0_13, %c0_14] : memref<1x200xf32, #tpu.memory_space<vmem>>, vector<1x200xf32>
      %17 = vector.broadcast %16 : vector<1x200xf32> to vector<16x200xf32>
      %18 = arith.mulf %15, %17 : vector<16x200xf32>
      %c0_15 = arith.constant 0 : index
      %c0_16 = arith.constant 0 : index
      %19 = vector.load %arg5[%c0_15, %c0_16] : memref<1x200xf32, #tpu.memory_space<vmem>>, vector<1x200xf32>
      %20 = vector.broadcast %19 : vector<1x200xf32> to vector<16x200xf32>
      %21 = arith.addf %18, %20 : vector<16x200xf32>
      %cst_17 = arith.constant 0.000000e+00 : f32
      %22 = vector.broadcast %cst_17 : f32 to vector<16x200xf32>
      %23 = arith.maximumf %21, %22 : vector<16x200xf32>
      %c0_18 = arith.constant 0 : index
      %c0_19 = arith.constant 0 : index
      %24 = vector.load %arg6[%c0_18, %c0_19] : memref<16x200xf32, #tpu.memory_space<vmem>>, vector<16x200xf32>
      tpu.vector_store %arg6[%c0_18, %c0_19], %23 {strides = array<i32>} : memref<16x200xf32, #tpu.memory_space<vmem>>, vector<16x200xf32>,
    } else {
    }
    return
  }
  func.func @transform_0(%arg0: i32) -> (i32, i32) {
    %c0_i32 = arith.constant 0 : i32
    %c0_i32_0 = arith.constant 0 : i32
    return %c0_i32, %arg0 : i32, i32
  }
  func.func @transform_1(%arg0: i32) -> (i32, i32) {
    %c0_i32 = arith.constant 0 : i32
    %c0_i32_0 = arith.constant 0 : i32
    return %arg0, %c0_i32 : i32, i32
  }
  func.func @transform_2(%arg0: i32) -> (i32, i32) {
    %c0_i32 = arith.constant 0 : i32
    %c0_i32_0 = arith.constant 0 : i32
    %c0_i32_1 = arith.constant 0 : i32
    return %c0_i32, %c0_i32_0 : i32, i32
  }
  func.func @transform_3(%arg0: i32) -> (i32, i32) {
    %c0_i32 = arith.constant 0 : i32
    %c0_i32_0 = arith.constant 0 : i32
    %c0_i32_1 = arith.constant 0 : i32
    return %c0_i32, %c0_i32_0 : i32, i32
  }
  func.func @transform_4(%arg0: i32) -> (i32, i32) {
    %c0_i32 = arith.constant 0 : i32
    %c0_i32_0 = arith.constant 0 : i32
    %c0_i32_1 = arith.constant 0 : i32
    return %c0_i32, %c0_i32_0 : i32, i32
  }
  func.func @transform_5(%arg0: i32) -> (i32, i32) {
    %c0_i32 = arith.constant 0 : i32
    %c0_i32_0 = arith.constant 0 : i32
    %c0_i32_1 = arith.constant 0 : i32
    return %c0_i32, %c0_i32_0 : i32, i32
  }
}

</mosaic_0001>

<llo_original>
// kernel: tpu_custom_call.1
$region0: #{tpu_custom_call.1}
  #allocation0 [shape = 'u32[]', space=smem, size = 0x4, offset = 0x4, fixed_abs, tag = 'smem constant byte address 0x4 - core index']
  #allocation1 [shape = 'u32[144,128]{1,0:T(1,128)}', space=vmem, size = 0x12000, scoped, tag = 'internal scratch']
  #allocation2 [shape = 'f32[16,200]{1,0:T(8,128)}', space=vmem, size = 0x4000, scoped, tag = 'scratch operand']
  %s0 = inlined_call_operand.vmem [shape: f32[16,10368], index: 0, kind: input, shape index: {}]
  %s1 = inlined_call_operand.vmem [shape: f32[10368,200], index: 1, kind: input, shape index: {}]
  %s2 = inlined_call_operand.vmem [shape: f32[1,200], index: 2, kind: input, shape index: {}]
  %s3 = inlined_call_operand.vmem [shape: f32[1,200], index: 3, kind: input, shape index: {}]
  %s4 = inlined_call_operand.vmem [shape: f32[1,200], index: 4, kind: input, shape index: {}]
  %s5 = inlined_call_operand.hbm [shape: f32[16,200], index: 5, kind: output, shape index: {}]
  %s6 = sld [smem:[#allocation0]]
  $region84: #{tpu_custom_call.1} parent=0
    _
  %s8 = ssub.s32 1, %s6
  %s9 = scalar_select 0, %s8, %s6
  $region1: #{tpu_custom_call.1} parent=0
    #allocation3 [shape = 'u8[147456]{0}', space=vmem, size = 0x24000, scoped, tag = 'input window, operand 0']
    #allocation4 [shape = 'u8[16384]{0}', space=vmem, size = 0x4000, scoped, tag = 'output window, operand 0, single buffered']
    #allocation5 [shape = 's32[2]{0}', space=sflag, size = 0x8, scoped, tag = 'scoped memory for tpu_custom_call.1']
    %10 = vsyncpa [#allocation5], 0
    loop: start=0, step=1, limit=11
    $region2: #{tpu_custom_call.1} parent=1 // loop_pre_header
      _
    $region3: #{tpu_custom_call.1} parent=1 // loop_header
      %s12 = sphi 0, %s16
      %p13 = scmp.ge.s32.totalorder %s12, 11
      %s22 = sphi 0, %s24
      %s25 = sphi 0, %s22
      %s26 = sphi 0, %s25
      %s42 = sphi 0, %s26
      %s48 = sphi 0, %s50
      %s51 = sphi 0, %s48
      %s52 = sphi 0, %s51
      %s68 = sphi 0, %s52
      %s72 = sphi 0, %s72
      %s74 = sphi 0, %s72
      %s75 = sphi 0, %s74
      %s89 = sphi 0, %s75
      %s93 = sphi 0, %s93
      %s95 = sphi 0, %s93
      %s96 = sphi 0, %s95
      %s110 = sphi 0, %s96
      %s114 = sphi 0, %s114
      %s116 = sphi 0, %s114
      %s117 = sphi 0, %s116
      %s131 = sphi 0, %s117
      %s135 = sphi 0, %s135
      %s137 = sphi 0, %s135
      %s138 = sphi 0, %s137
      %s152 = sphi 0, %s138
    $region4: #{tpu_custom_call.1} parent=1 // loop_header_branch
      %15 = sbr.rel (%p13) target = $region8
    $region5: #{tpu_custom_call.1} parent=1 // loop_body
      %s17 = ssub.s32 %s12, 1
      %s18 = ssub.s32 %s12, 2
      %s19 = sadd.s32 %s12, 1
      %s20 = ssub.s32 %s12, %s19
      %p21 = scmp.eq.s32.totalorder %s20, 0
      %s23 = sadd.s32 %s22, 1
      %s24 = scalar_select %p21, %s22, %s23
      %p27 = pneg %p21
      %p28 = scmp.eq.s32.totalorder %s12, 8
      %p29 = por %p27, %p28
      %p30 = scmp.ne.s32.totalorder %s22, %s25
      %p31 = scmp.eq.s32.totalorder %s12, 0
      %p32 = por %p30, %p31
      %p33 = scmp.ne.s32.totalorder %s22, %s25
      %p34 = scmp.eq.s32.totalorder %s17, 8
      %p35 = por %p33, %p34
      %p36 = scmp.ne.s32.totalorder %s25, %s26
      %p37 = scmp.eq.s32.totalorder %s17, 0
      %p38 = por %p36, %p37
      %p39 = scmp.ne.s32.totalorder %s25, %s26
      %p40 = scmp.eq.s32.totalorder %s18, 8
      %p41 = por %p39, %p40
      %p43 = scmp.ne.s32.totalorder %s26, %s42
      %p44 = scmp.eq.s32.totalorder %s18, 0
      %p45 = por %p43, %p44
      %s46 = ssub.s32 %s12, %s19
      %p47 = scmp.eq.s32.totalorder %s46, 0
      %s49 = sadd.s32 %s48, 1
      %s50 = scalar_select %p47, %s48, %s49
      %p53 = pneg %p47
      %p54 = scmp.eq.s32.totalorder %s12, 8
      %p55 = por %p53, %p54
      %p56 = scmp.ne.s32.totalorder %s48, %s51
      %p57 = scmp.eq.s32.totalorder %s12, 0
      %p58 = por %p56, %p57
      %p59 = scmp.ne.s32.totalorder %s48, %s51
      %p60 = scmp.eq.s32.totalorder %s17, 8
      %p61 = por %p59, %p60
      %p62 = scmp.ne.s32.totalorder %s51, %s52
      %p63 = scmp.eq.s32.totalorder %s17, 0
      %p64 = por %p62, %p63
      %p65 = scmp.ne.s32.totalorder %s51, %s52
      %p66 = scmp.eq.s32.totalorder %s18, 8
      %p67 = por %p65, %p66
      %p69 = scmp.ne.s32.totalorder %s52, %s68
      %p70 = scmp.eq.s32.totalorder %s18, 0
      %p71 = por %p69, %p70
      %s73 = sadd.s32 %s72, 1
      %p76 = scmp.eq.s32.totalorder %s12, 8
      %p77 = scmp.ne.s32.totalorder %s72, %s74
      %p78 = scmp.eq.s32.totalorder %s12, 0
      %p79 = por %p77, %p78
      %p80 = scmp.ne.s32.totalorder %s72, %s74
      %p81 = scmp.eq.s32.totalorder %s17, 8
      %p82 = por %p80, %p81
      %p83 = scmp.ne.s32.totalorder %s74, %s75
      %p84 = scmp.eq.s32.totalorder %s17, 0
      %p85 = por %p83, %p84
      %p86 = scmp.ne.s32.totalorder %s74, %s75
      %p87 = scmp.eq.s32.totalorder %s18, 8
      %p88 = por %p86, %p87
      %p90 = scmp.ne.s32.totalorder %s75, %s89
      %p91 = scmp.eq.s32.totalorder %s18, 0
      %p92 = por %p90, %p91
      %s94 = sadd.s32 %s93, 1
      %p97 = scmp.eq.s32.totalorder %s12, 8
      %p98 = scmp.ne.s32.totalorder %s93, %s95
      %p99 = scmp.eq.s32.totalorder %s12, 0
      %p100 = por %p98, %p99
      %p101 = scmp.ne.s32.totalorder %s93, %s95
      %p102 = scmp.eq.s32.totalorder %s17, 8
      %p103 = por %p101, %p102
      %p104 = scmp.ne.s32.totalorder %s95, %s96
      %p105 = scmp.eq.s32.totalorder %s17, 0
      %p106 = por %p104, %p105
      %p107 = scmp.ne.s32.totalorder %s95, %s96
      %p108 = scmp.eq.s32.totalorder %s18, 8
      %p109 = por %p107, %p108
      %p111 = scmp.ne.s32.totalorder %s96, %s110
      %p112 = scmp.eq.s32.totalorder %s18, 0
      %p113 = por %p111, %p112
      %s115 = sadd.s32 %s114, 1
      %p118 = scmp.eq.s32.totalorder %s12, 8
      %p119 = scmp.ne.s32.totalorder %s114, %s116
      %p120 = scmp.eq.s32.totalorder %s12, 0
      %p121 = por %p119, %p120
      %p122 = scmp.ne.s32.totalorder %s114, %s116
      %p123 = scmp.eq.s32.totalorder %s17, 8
      %p124 = por %p122, %p123
      %p125 = scmp.ne.s32.totalorder %s116, %s117
      %p126 = scmp.eq.s32.totalorder %s17, 0
      %p127 = por %p125, %p126
      %p128 = scmp.ne.s32.totalorder %s116, %s117
      %p129 = scmp.eq.s32.totalorder %s18, 8
      %p130 = por %p128, %p129
      %p132 = scmp.ne.s32.totalorder %s117, %s131
      %p133 = scmp.eq.s32.totalorder %s18, 0
      %p134 = por %p132, %p133
      %s136 = sadd.s32 %s135, 1
      %p139 = scmp.eq.s32.totalorder %s12, 8
      %p140 = scmp.ne.s32.totalorder %s135, %s137
      %p141 = scmp.eq.s32.totalorder %s12, 0
      %p142 = por %p140, %p141
      %p143 = scmp.ne.s32.totalorder %s135, %s137
      %p144 = scmp.eq.s32.totalorder %s17, 8
      %p145 = por %p143, %p144
      %p146 = scmp.ne.s32.totalorder %s137, %s138
      %p147 = scmp.eq.s32.totalorder %s17, 0
      %p148 = por %p146, %p147
      %p149 = scmp.ne.s32.totalorder %s137, %s138
      %p150 = scmp.eq.s32.totalorder %s18, 8
      %p151 = por %p149, %p150
      %p153 = scmp.ne.s32.totalorder %s138, %s152
      %p154 = scmp.eq.s32.totalorder %s18, 0
      %p155 = por %p153, %p154
      %p156 = scmp.le.s32.totalorder 1, %s12
      %p157 = scmp.lt.s32.totalorder %s12, 10
      %p158 = pnand %p156, %p157
      %p159 = pneg %p158
      // Predicated region
      $region9: #{tpu_custom_call.1} parent=5 // pred_check
        _
      $region10: #{tpu_custom_call.1} parent=5 // pred_check_branch
        %161 = sbr.rel (%p158) target = $region12
      $region11: #{tpu_custom_call.1} parent=5 // pred_region
        %s162 = ssub.s32 %s12, 1
        // Predicated region
        $region13: #{tpu_custom_call.1} parent=11 // pred_check
          %p163 = pneg %p85
        $region14: #{tpu_custom_call.1} parent=11 // pred_check_branch
          %165 = sbr.rel (%p163) target = $region16
        $region15: #{tpu_custom_call.1} parent=11 // pred_region
          _
        $region16: #{tpu_custom_call.1} parent=11 // pred_fallthru
          _
        // Predicated region
        $region17: #{tpu_custom_call.1} parent=11 // pred_check
          %p166 = pneg %p106
        $region18: #{tpu_custom_call.1} parent=11 // pred_check_branch
          %168 = sbr.rel (%p166) target = $region20
        $region19: #{tpu_custom_call.1} parent=11 // pred_region
          _
        $region20: #{tpu_custom_call.1} parent=11 // pred_fallthru
          _
        // Predicated region
        $region21: #{tpu_custom_call.1} parent=11 // pred_check
          %p169 = pneg %p127
        $region22: #{tpu_custom_call.1} parent=11 // pred_check_branch
          %171 = sbr.rel (%p169) target = $region24
        $region23: #{tpu_custom_call.1} parent=11 // pred_region
          _
        $region24: #{tpu_custom_call.1} parent=11 // pred_fallthru
          _
      $region12: #{tpu_custom_call.1} parent=5 // pred_fallthru
        _
      %p172 = scmp.lt.s32.totalorder %s12, 9
      // Predicated region
      $region25: #{tpu_custom_call.1} parent=5 // pred_check
        %p173 = pneg %p172
      $region26: #{tpu_custom_call.1} parent=5 // pred_check_branch
        %175 = sbr.rel (%p173) target = $region28
      $region27: #{tpu_custom_call.1} parent=5 // pred_region
        // Predicated region
        $region29: #{tpu_custom_call.1} parent=27 // pred_check
          %p176 = pneg %p32
        $region30: #{tpu_custom_call.1} parent=27 // pred_check_branch
          %178 = sbr.rel (%p176) target = $region32
        $region31: #{tpu_custom_call.1} parent=27 // pred_region
          %s179 = sand.u32 %s22, 1
          %s180 = sand.u32 %s22, 1
          %s181 = smul.addr %s180, 144
          %s182 = scalar_lea.vmem [#allocation3], %s181
          %s183 = smul.u32 9, %s12
          %s184 = smul.addr %s183, 8
          %s185 = scalar_lea.vmem %s0, %s184
          // Predicated region
          $region33: #{tpu_custom_call.1} parent=31 // pred_check
            _
          $region34: #{tpu_custom_call.1} parent=31 // pred_check_branch
            %187 = sbr.rel (0) target = $region36
          $region35: #{tpu_custom_call.1} parent=31 // pred_region
            // Predicated region
            $region37: #{tpu_custom_call.1} parent=35 // pred_check
              _
            $region38: #{tpu_custom_call.1} parent=35 // pred_check_branch
              %189 = sbr.rel (0) target = $region40
            $region39: #{tpu_custom_call.1} parent=35 // pred_region
              loop: start=0, step=1, limit=1
              $region41: #{tpu_custom_call.1} parent=39 // loop_pre_header
                _
              $region42: #{tpu_custom_call.1} parent=39 // loop_header
                %s191 = sphi 0, %s195
                %p192 = scmp.ge.s32.totalorder %s191, 1
                %s196 = sphi %s185, %s185
                %s197 = sphi %s182, %s182
              $region43: #{tpu_custom_call.1} parent=39 // loop_header_branch
                %194 = sbr.rel (%p192) target = $region47
              $region44: #{tpu_custom_call.1} parent=39 // loop_body
                %v198 = vld [vmem:[%s196] sm:$0xff]
                %199 = vst [vmem:[%s197] sm:$0xff] %v198
                %v200 = vld [vmem:[%s196 + $0x8] sm:$0xff]
                %201 = vst [vmem:[%s197 + $0x8] sm:$0xff] %v200
                %v202 = vld [vmem:[%s196 + $0x10] sm:$0xff]
                %203 = vst [vmem:[%s197 + $0x10] sm:$0xff] %v202
                %v204 = vld [vmem:[%s196 + $0x18] sm:$0xff]
                %205 = vst [vmem:[%s197 + $0x18] sm:$0xff] %v204
                %v206 = vld [vmem:[%s196 + $0x20] sm:$0xff]
                %207 = vst [vmem:[%s197 + $0x20] sm:$0xff] %v206
                %v208 = vld [vmem:[%s196 + $0x28] sm:$0xff]
                %209 = vst [vmem:[%s197 + $0x28] sm:$0xff] %v208
                %v210 = vld [vmem:[%s196 + $0x30] sm:$0xff]
                %211 = vst [vmem:[%s197 + $0x30] sm:$0xff] %v210
                %v212 = vld [vmem:[%s196 + $0x38] sm:$0xff]
                %213 = vst [vmem:[%s197 + $0x38] sm:$0xff] %v212
                %v214 = vld [vmem:[%s196 + $0x40] sm:$0xff]
                %215 = vst [vmem:[%s197 + $0x40] sm:$0xff] %v214
                %v216 = vld [vmem:[%s196 + $0x288] sm:$0xff]
                %217 = vst [vmem:[%s197 + $0x48] sm:$0xff] %v216
                %v218 = vld [vmem:[%s196 + $0x290] sm:$0xff]
                %219 = vst [vmem:[%s197 + $0x50] sm:$0xff] %v218
                %v220 = vld [vmem:[%s196 + $0x298] sm:$0xff]
                %221 = vst [vmem:[%s197 + $0x58] sm:$0xff] %v220
                %v222 = vld [vmem:[%s196 + $0x2a0] sm:$0xff]
                %223 = vst [vmem:[%s197 + $0x60] sm:$0xff] %v222
                %v224 = vld [vmem:[%s196 + $0x2a8] sm:$0xff]
                %225 = vst [vmem:[%s197 + $0x68] sm:$0xff] %v224
                %v226 = vld [vmem:[%s196 + $0x2b0] sm:$0xff]
                %227 = vst [vmem:[%s197 + $0x70] sm:$0xff] %v226
                %v228 = vld [vmem:[%s196 + $0x2b8] sm:$0xff]
                %229 = vst [vmem:[%s197 + $0x78] sm:$0xff] %v228
                %v230 = vld [vmem:[%s196 + $0x2c0] sm:$0xff]
                %231 = vst [vmem:[%s197 + $0x80] sm:$0xff] %v230
                %v232 = vld [vmem:[%s196 + $0x2c8] sm:$0xff]
                %233 = vst [vmem:[%s197 + $0x88] sm:$0xff] %v232
              $region45: #{tpu_custom_call.1} parent=39 // loop_footer
                %s195 = sadd.s32 1, %s191
              $region46: #{tpu_custom_call.1} parent=39 // loop_footer_branch
                %190 = sbr.rel target = $region42
              $region47: #{tpu_custom_call.1} parent=39 // loop_exit
                _
            $region40: #{tpu_custom_call.1} parent=35 // pred_fallthru
              _
            // Predicated region
            $region48: #{tpu_custom_call.1} parent=35 // pred_check
              _
            $region49: #{tpu_custom_call.1} parent=35 // pred_check_branch
              %235 = sbr.rel target = $region51
            $region50: #{tpu_custom_call.1} parent=35 // pred_region
              _
            $region51: #{tpu_custom_call.1} parent=35 // pred_fallthru
              _
          $region36: #{tpu_custom_call.1} parent=31 // pred_fallthru
            _
          %236 = vnop
        $region32: #{tpu_custom_call.1} parent=27 // pred_fallthru
          _
        // Predicated region
        $region52: #{tpu_custom_call.1} parent=27 // pred_check
          %p237 = pneg %p58
        $region53: #{tpu_custom_call.1} parent=27 // pred_check_branch
          %239 = sbr.rel (%p237) target = $region55
        $region54: #{tpu_custom_call.1} parent=27 // pred_region
          %s240 = smul.u32 144, %s12
          %p241 = scmp.lt.s32.totalorder %s240, 1295
          %s242 = scalar_select %p241, %s240, 1295
          %s243 = smul.addr %s242, 2
          %s244 = smul.addr %s243, 8
          %s245 = scalar_lea.vmem %s1, %s244
          %s246 = smul.u32 144, %s12
        $region55: #{tpu_custom_call.1} parent=27 // pred_fallthru
          _
      $region28: #{tpu_custom_call.1} parent=5 // pred_fallthru
        _
      %p247 = scmp.le.s32.totalorder 1, %s12
      %p248 = scmp.lt.s32.totalorder %s12, 10
      %p249 = pnand %p247, %p248
      %p250 = pneg %p249
      // Predicated region
      $region56: #{tpu_custom_call.1} parent=5 // pred_check
        _
      $region57: #{tpu_custom_call.1} parent=5 // pred_check_branch
        %252 = sbr.rel (%p249) target = $region59
      $region58: #{tpu_custom_call.1} parent=5 // pred_region
        %s253 = ssub.s32 %s12, 1
        %s254 = sand.u32 %s25, 1
        %s255 = sand.u32 %s25, 1
        %s256 = smul.addr %s255, 144
        %s257 = scalar_lea.vmem [#allocation3], %s256
        // Predicated region
        $region60: #{tpu_custom_call.1} parent=58 // pred_check
          %p258 = pneg %p38
        $region61: #{tpu_custom_call.1} parent=58 // pred_check_branch
          %260 = sbr.rel (%p258) target = $region63
        $region62: #{tpu_custom_call.1} parent=58 // pred_region
          _
        $region63: #{tpu_custom_call.1} parent=58 // pred_fallthru
          _
        %s261 = sand.u32 %s25, 1
        %s262 = sand.u32 %s25, 1
        %s263 = smul.addr %s262, 144
        %s264 = scalar_lea.vmem [#allocation3], %s263
        %p265 = pneg %p38
        %p266 = pneg %p35
        %s267 = smul.u32 144, %s17
        %p268 = scmp.lt.s32.totalorder %s267, 1295
        %s269 = scalar_select %p268, %s267, 1295
        %s270 = smul.addr %s269, 2
        %s271 = smul.addr %s270, 8
        %s272 = scalar_lea.vmem %s1, %s271
        %p273 = pneg %p64
        %p274 = pneg %p61
        %p275 = pneg %p85
        %p276 = pneg %p82
        %p277 = pneg %p106
        %p278 = pneg %p103
        %p279 = pneg %p127
        %p280 = pneg %p124
        %p281 = pneg %p148
        %p282 = pneg %p145
        %s283 = smul.u32 9, %s17
        %s284 = smul.u32 144, %s17
        %p285 = scmp.lt.s32.totalorder %s284, 1295
        %s286 = scalar_select %p285, %s284, 1295
        %s287 = smul.addr %s286, 2
        %s288 = smul.addr %s287, 8
        %s289 = scalar_lea.vmem %s1, %s288
        %s290 = smul.u32 144, %s17
        %p291 = scmp.eq.s32.totalorder %s17, 0
        // Predicated region
        $region64: #{tpu_custom_call.1} parent=58 // pred_check
          %p292 = pneg %p291
        $region65: #{tpu_custom_call.1} parent=58 // pred_check_branch
          %294 = sbr.rel (%p292) target = $region67
        $region66: #{tpu_custom_call.1} parent=58 // pred_region
          %295 = vst [vmem:[#allocation2] sm:$0xff] 0.0
          %vm296 = vcmask 588800
          %297 = vst.msk [vmem:[#allocation2 + $0x8] sm:$0xff] %vm296, 0.0
          %298 = vst [vmem:[#allocation2 + $0x10] sm:$0xff] 0.0
          %299 = vst.msk [vmem:[#allocation2 + $0x18] sm:$0xff] %vm296, 0.0
        $region67: #{tpu_custom_call.1} parent=58 // pred_fallthru
          _
        %v300 = vld [vmem:[#allocation2] sm:$0xff]
        %v301 = vld [vmem:[#allocation2 + $0x8] sm:$0xff]
        %v302 = vld [vmem:[#allocation2 + $0x10] sm:$0xff]
        %v303 = vld [vmem:[#allocation2 + $0x18] sm:$0xff]
        %v304 = vld [vmem:[%s257] sm:$0xff]
        %v305 = vld [vmem:[%s257 + $0x8] sm:$0xff]
        %v306 = vld [vmem:[%s257 + $0x10] sm:$0xff]
        %v307 = vld [vmem:[%s257 + $0x18] sm:$0xff]
        %v308 = vld [vmem:[%s257 + $0x20] sm:$0xff]
        %v309 = vld [vmem:[%s257 + $0x28] sm:$0xff]
        %v310 = vld [vmem:[%s257 + $0x30] sm:$0xff]
        %v311 = vld [vmem:[%s257 + $0x38] sm:$0xff]
        %v312 = vld [vmem:[%s257 + $0x40] sm:$0xff]
        %v313 = vld [vmem:[%s257 + $0x48] sm:$0xff]
        %v314 = vld [vmem:[%s257 + $0x50] sm:$0xff]
        %v315 = vld [vmem:[%s257 + $0x58] sm:$0xff]
        %v316 = vld [vmem:[%s257 + $0x60] sm:$0xff]
        %v317 = vld [vmem:[%s257 + $0x68] sm:$0xff]
        %v318 = vld [vmem:[%s257 + $0x70] sm:$0xff]
        %v319 = vld [vmem:[%s257 + $0x78] sm:$0xff]
        %v320 = vld [vmem:[%s257 + $0x80] sm:$0xff]
        %v321 = vld [vmem:[%s257 + $0x88] sm:$0xff]
        %v322 = vld [vmem:[%s289] sm:$0xff]
        %v323 = vld [vmem:[%s289 + $0x8] sm:$0xff]
        %v324 = vld [vmem:[%s289 + $0x10] sm:$0xff]
        %v325 = vld [vmem:[%s289 + $0x18] sm:$0xff]
        %v326 = vld [vmem:[%s289 + $0x20] sm:$0xff]
        %v327 = vld [vmem:[%s289 + $0x28] sm:$0xff]
        %v328 = vld [vmem:[%s289 + $0x30] sm:$0xff]
        %v329 = vld [vmem:[%s289 + $0x38] sm:$0xff]
        %v330 = vld [vmem:[%s289 + $0x40] sm:$0xff]
        %v331 = vld [vmem:[%s289 + $0x48] sm:$0xff]
        %v332 = vld [vmem:[%s289 + $0x50] sm:$0xff]
        %v333 = vld [vmem:[%s289 + $0x58] sm:$0xff]
        %v334 = vld [vmem:[%s289 + $0x60] sm:$0xff]
        %v335 = vld [vmem:[%s289 + $0x68] sm:$0xff]
        %v336 = vld [vmem:[%s289 + $0x70] sm:$0xff]
        %v337 = vld [vmem:[%s289 + $0x78] sm:$0xff]
        %v338 = vld [vmem:[%s289 + $0x80] sm:$0xff]
        %v339 = vld [vmem:[%s289 + $0x88] sm:$0xff]
        %v340 = vld [vmem:[%s289 + $0x90] sm:$0xff]
        %v341 = vld [vmem:[%s289 + $0x98] sm:$0xff]
        %v342 = vld [vmem:[%s289 + $0xa0] sm:$0xff]
        %v343 = vld [vmem:[%s289 + $0xa8] sm:$0xff]
        %v344 = vld [vmem:[%s289 + $0xb0] sm:$0xff]
        %v345 = vld [vmem:[%s289 + $0xb8] sm:$0xff]
        %v346 = vld [vmem:[%s289 + $0xc0] sm:$0xff]
        %v347 = vld [vmem:[%s289 + $0xc8] sm:$0xff]
        %v348 = vld [vmem:[%s289 + $0xd0] sm:$0xff]
        %v349 = vld [vmem:[%s289 + $0xd8] sm:$0xff]
        %v350 = vld [vmem:[%s289 + $0xe0] sm:$0xff]
        %v351 = vld [vmem:[%s289 + $0xe8] sm:$0xff]
        %v352 = vld [vmem:[%s289 + $0xf0] sm:$0xff]
        %v353 = vld [vmem:[%s289 + $0xf8] sm:$0xff]
        %v354 = vld [vmem:[%s289 + $0x100] sm:$0xff]
        %v355 = vld [vmem:[%s289 + $0x108] sm:$0xff]
        %v356 = vld [vmem:[%s289 + $0x110] sm:$0xff]
        %v357 = vld [vmem:[%s289 + $0x118] sm:$0xff]
        %v358 = vld [vmem:[%s289 + $0x120] sm:$0xff]
        %v359 = vld [vmem:[%s289 + $0x128] sm:$0xff]
        %v360 = vld [vmem:[%s289 + $0x130] sm:$0xff]
        %v361 = vld [vmem:[%s289 + $0x138] sm:$0xff]
        %v362 = vld [vmem:[%s289 + $0x140] sm:$0xff]
        %v363 = vld [vmem:[%s289 + $0x148] sm:$0xff]
        %v364 = vld [vmem:[%s289 + $0x150] sm:$0xff]
        %v365 = vld [vmem:[%s289 + $0x158] sm:$0xff]
        %v366 = vld [vmem:[%s289 + $0x160] sm:$0xff]
        %v367 = vld [vmem:[%s289 + $0x168] sm:$0xff]
        %v368 = vld [vmem:[%s289 + $0x170] sm:$0xff]
        %v369 = vld [vmem:[%s289 + $0x178] sm:$0xff]
        %v370 = vld [vmem:[%s289 + $0x180] sm:$0xff]
        %v371 = vld [vmem:[%s289 + $0x188] sm:$0xff]
        %v372 = vld [vmem:[%s289 + $0x190] sm:$0xff]
        %v373 = vld [vmem:[%s289 + $0x198] sm:$0xff]
        %v374 = vld [vmem:[%s289 + $0x1a0] sm:$0xff]
        %v375 = vld [vmem:[%s289 + $0x1a8] sm:$0xff]
        %v376 = vld [vmem:[%s289 + $0x1b0] sm:$0xff]
        %v377 = vld [vmem:[%s289 + $0x1b8] sm:$0xff]
        %v378 = vld [vmem:[%s289 + $0x1c0] sm:$0xff]
        %v379 = vld [vmem:[%s289 + $0x1c8] sm:$0xff]
        %v380 = vld [vmem:[%s289 + $0x1d0] sm:$0xff]
        %v381 = vld [vmem:[%s289 + $0x1d8] sm:$0xff]
        %v382 = vld [vmem:[%s289 + $0x1e0] sm:$0xff]
        %v383 = vld [vmem:[%s289 + $0x1e8] sm:$0xff]
        %v384 = vld [vmem:[%s289 + $0x1f0] sm:$0xff]
        %v385 = vld [vmem:[%s289 + $0x1f8] sm:$0xff]
        %v386 = vld [vmem:[%s289 + $0x200] sm:$0xff]
        %v387 = vld [vmem:[%s289 + $0x208] sm:$0xff]
        %v388 = vld [vmem:[%s289 + $0x210] sm:$0xff]
        %v389 = vld [vmem:[%s289 + $0x218] sm:$0xff]
        %v390 = vld [vmem:[%s289 + $0x220] sm:$0xff]
        %v391 = vld [vmem:[%s289 + $0x228] sm:$0xff]
        %v392 = vld [vmem:[%s289 + $0x230] sm:$0xff]
        %v393 = vld [vmem:[%s289 + $0x238] sm:$0xff]
        %v394 = vld [vmem:[%s289 + $0x240] sm:$0xff]
        %v395 = vld [vmem:[%s289 + $0x248] sm:$0xff]
        %v396 = vld [vmem:[%s289 + $0x250] sm:$0xff]
        %v397 = vld [vmem:[%s289 + $0x258] sm:$0xff]
        %v398 = vld [vmem:[%s289 + $0x260] sm:$0xff]
        %v399 = vld [vmem:[%s289 + $0x268] sm:$0xff]
        %v400 = vld [vmem:[%s289 + $0x270] sm:$0xff]
        %v401 = vld [vmem:[%s289 + $0x278] sm:$0xff]
        %v402 = vld [vmem:[%s289 + $0x280] sm:$0xff]
        %v403 = vld [vmem:[%s289 + $0x288] sm:$0xff]
        %v404 = vld [vmem:[%s289 + $0x290] sm:$0xff]
        %v405 = vld [vmem:[%s289 + $0x298] sm:$0xff]
        %v406 = vld [vmem:[%s289 + $0x2a0] sm:$0xff]
        %v407 = vld [vmem:[%s289 + $0x2a8] sm:$0xff]
        %v408 = vld [vmem:[%s289 + $0x2b0] sm:$0xff]
        %v409 = vld [vmem:[%s289 + $0x2b8] sm:$0xff]
        %v410 = vld [vmem:[%s289 + $0x2c0] sm:$0xff]
        %v411 = vld [vmem:[%s289 + $0x2c8] sm:$0xff]
        %v412 = vld [vmem:[%s289 + $0x2d0] sm:$0xff]
        %v413 = vld [vmem:[%s289 + $0x2d8] sm:$0xff]
        %v414 = vld [vmem:[%s289 + $0x2e0] sm:$0xff]
        %v415 = vld [vmem:[%s289 + $0x2e8] sm:$0xff]
        %v416 = vld [vmem:[%s289 + $0x2f0] sm:$0xff]
        %v417 = vld [vmem:[%s289 + $0x2f8] sm:$0xff]
        %v418 = vld [vmem:[%s289 + $0x300] sm:$0xff]
        %v419 = vld [vmem:[%s289 + $0x308] sm:$0xff]
        %v420 = vld [vmem:[%s289 + $0x310] sm:$0xff]
        %v421 = vld [vmem:[%s289 + $0x318] sm:$0xff]
        %v422 = vld [vmem:[%s289 + $0x320] sm:$0xff]
        %v423 = vld [vmem:[%s289 + $0x328] sm:$0xff]
        %v424 = vld [vmem:[%s289 + $0x330] sm:$0xff]
        %v425 = vld [vmem:[%s289 + $0x338] sm:$0xff]
        %v426 = vld [vmem:[%s289 + $0x340] sm:$0xff]
        %v427 = vld [vmem:[%s289 + $0x348] sm:$0xff]
        %v428 = vld [vmem:[%s289 + $0x350] sm:$0xff]
        %v429 = vld [vmem:[%s289 + $0x358] sm:$0xff]
        %v430 = vld [vmem:[%s289 + $0x360] sm:$0xff]
        %v431 = vld [vmem:[%s289 + $0x368] sm:$0xff]
        %v432 = vld [vmem:[%s289 + $0x370] sm:$0xff]
        %v433 = vld [vmem:[%s289 + $0x378] sm:$0xff]
        %v434 = vld [vmem:[%s289 + $0x380] sm:$0xff]
        %v435 = vld [vmem:[%s289 + $0x388] sm:$0xff]
        %v436 = vld [vmem:[%s289 + $0x390] sm:$0xff]
        %v437 = vld [vmem:[%s289 + $0x398] sm:$0xff]
        %v438 = vld [vmem:[%s289 + $0x3a0] sm:$0xff]
        %v439 = vld [vmem:[%s289 + $0x3a8] sm:$0xff]
        %v440 = vld [vmem:[%s289 + $0x3b0] sm:$0xff]
        %v441 = vld [vmem:[%s289 + $0x3b8] sm:$0xff]
        %v442 = vld [vmem:[%s289 + $0x3c0] sm:$0xff]
        %v443 = vld [vmem:[%s289 + $0x3c8] sm:$0xff]
        %v444 = vld [vmem:[%s289 + $0x3d0] sm:$0xff]
        %v445 = vld [vmem:[%s289 + $0x3d8] sm:$0xff]
        %v446 = vld [vmem:[%s289 + $0x3e0] sm:$0xff]
        %v447 = vld [vmem:[%s289 + $0x3e8] sm:$0xff]
        %v448 = vld [vmem:[%s289 + $0x3f0] sm:$0xff]
        %v449 = vld [vmem:[%s289 + $0x3f8] sm:$0xff]
        %v450 = vld [vmem:[%s289 + $0x400] sm:$0xff]
        %v451 = vld [vmem:[%s289 + $0x408] sm:$0xff]
        %v452 = vld [vmem:[%s289 + $0x410] sm:$0xff]
        %v453 = vld [vmem:[%s289 + $0x418] sm:$0xff]
        %v454 = vld [vmem:[%s289 + $0x420] sm:$0xff]
        %v455 = vld [vmem:[%s289 + $0x428] sm:$0xff]
        %v456 = vld [vmem:[%s289 + $0x430] sm:$0xff]
        %v457 = vld [vmem:[%s289 + $0x438] sm:$0xff]
        %v458 = vld [vmem:[%s289 + $0x440] sm:$0xff]
        %v459 = vld [vmem:[%s289 + $0x448] sm:$0xff]
        %v460 = vld [vmem:[%s289 + $0x450] sm:$0xff]
        %v461 = vld [vmem:[%s289 + $0x458] sm:$0xff]
        %v462 = vld [vmem:[%s289 + $0x460] sm:$0xff]
        %v463 = vld [vmem:[%s289 + $0x468] sm:$0xff]
        %v464 = vld [vmem:[%s289 + $0x470] sm:$0xff]
        %v465 = vld [vmem:[%s289 + $0x478] sm:$0xff]
        %v466 = vld [vmem:[%s289 + $0x480] sm:$0xff]
        %v467 = vld [vmem:[%s289 + $0x488] sm:$0xff]
        %v468 = vld [vmem:[%s289 + $0x490] sm:$0xff]
        %v469 = vld [vmem:[%s289 + $0x498] sm:$0xff]
        %v470 = vld [vmem:[%s289 + $0x4a0] sm:$0xff]
        %v471 = vld [vmem:[%s289 + $0x4a8] sm:$0xff]
        %v472 = vld [vmem:[%s289 + $0x4b0] sm:$0xff]
        %v473 = vld [vmem:[%s289 + $0x4b8] sm:$0xff]
        %v474 = vld [vmem:[%s289 + $0x4c0] sm:$0xff]
        %v475 = vld [vmem:[%s289 + $0x4c8] sm:$0xff]
        %v476 = vld [vmem:[%s289 + $0x4d0] sm:$0xff]
        %v477 = vld [vmem:[%s289 + $0x4d8] sm:$0xff]
        %v478 = vld [vmem:[%s289 + $0x4e0] sm:$0xff]
        %v479 = vld [vmem:[%s289 + $0x4e8] sm:$0xff]
        %v480 = vld [vmem:[%s289 + $0x4f0] sm:$0xff]
        %v481 = vld [vmem:[%s289 + $0x4f8] sm:$0xff]
        %v482 = vld [vmem:[%s289 + $0x500] sm:$0xff]
        %v483 = vld [vmem:[%s289 + $0x508] sm:$0xff]
        %v484 = vld [vmem:[%s289 + $0x510] sm:$0xff]
        %v485 = vld [vmem:[%s289 + $0x518] sm:$0xff]
        %v486 = vld [vmem:[%s289 + $0x520] sm:$0xff]
        %v487 = vld [vmem:[%s289 + $0x528] sm:$0xff]
        %v488 = vld [vmem:[%s289 + $0x530] sm:$0xff]
        %v489 = vld [vmem:[%s289 + $0x538] sm:$0xff]
        %v490 = vld [vmem:[%s289 + $0x540] sm:$0xff]
        %v491 = vld [vmem:[%s289 + $0x548] sm:$0xff]
        %v492 = vld [vmem:[%s289 + $0x550] sm:$0xff]
        %v493 = vld [vmem:[%s289 + $0x558] sm:$0xff]
        %v494 = vld [vmem:[%s289 + $0x560] sm:$0xff]
        %v495 = vld [vmem:[%s289 + $0x568] sm:$0xff]
        %v496 = vld [vmem:[%s289 + $0x570] sm:$0xff]
        %v497 = vld [vmem:[%s289 + $0x578] sm:$0xff]
        %v498 = vld [vmem:[%s289 + $0x580] sm:$0xff]
        %v499 = vld [vmem:[%s289 + $0x588] sm:$0xff]
        %v500 = vld [vmem:[%s289 + $0x590] sm:$0xff]
        %v501 = vld [vmem:[%s289 + $0x598] sm:$0xff]
        %v502 = vld [vmem:[%s289 + $0x5a0] sm:$0xff]
        %v503 = vld [vmem:[%s289 + $0x5a8] sm:$0xff]
        %v504 = vld [vmem:[%s289 + $0x5b0] sm:$0xff]
        %v505 = vld [vmem:[%s289 + $0x5b8] sm:$0xff]
        %v506 = vld [vmem:[%s289 + $0x5c0] sm:$0xff]
        %v507 = vld [vmem:[%s289 + $0x5c8] sm:$0xff]
        %v508 = vld [vmem:[%s289 + $0x5d0] sm:$0xff]
        %v509 = vld [vmem:[%s289 + $0x5d8] sm:$0xff]
        %v510 = vld [vmem:[%s289 + $0x5e0] sm:$0xff]
        %v511 = vld [vmem:[%s289 + $0x5e8] sm:$0xff]
        %v512 = vld [vmem:[%s289 + $0x5f0] sm:$0xff]
        %v513 = vld [vmem:[%s289 + $0x5f8] sm:$0xff]
        %v514 = vld [vmem:[%s289 + $0x600] sm:$0xff]
        %v515 = vld [vmem:[%s289 + $0x608] sm:$0xff]
        %v516 = vld [vmem:[%s289 + $0x610] sm:$0xff]
        %v517 = vld [vmem:[%s289 + $0x618] sm:$0xff]
        %v518 = vld [vmem:[%s289 + $0x620] sm:$0xff]
        %v519 = vld [vmem:[%s289 + $0x628] sm:$0xff]
        %v520 = vld [vmem:[%s289 + $0x630] sm:$0xff]
        %v521 = vld [vmem:[%s289 + $0x638] sm:$0xff]
        %v522 = vld [vmem:[%s289 + $0x640] sm:$0xff]
        %v523 = vld [vmem:[%s289 + $0x648] sm:$0xff]
        %v524 = vld [vmem:[%s289 + $0x650] sm:$0xff]
        %v525 = vld [vmem:[%s289 + $0x658] sm:$0xff]
        %v526 = vld [vmem:[%s289 + $0x660] sm:$0xff]
        %v527 = vld [vmem:[%s289 + $0x668] sm:$0xff]
        %v528 = vld [vmem:[%s289 + $0x670] sm:$0xff]
        %v529 = vld [vmem:[%s289 + $0x678] sm:$0xff]
        %v530 = vld [vmem:[%s289 + $0x680] sm:$0xff]
        %v531 = vld [vmem:[%s289 + $0x688] sm:$0xff]
        %v532 = vld [vmem:[%s289 + $0x690] sm:$0xff]
        %v533 = vld [vmem:[%s289 + $0x698] sm:$0xff]
        %v534 = vld [vmem:[%s289 + $0x6a0] sm:$0xff]
        %v535 = vld [vmem:[%s289 + $0x6a8] sm:$0xff]
        %v536 = vld [vmem:[%s289 + $0x6b0] sm:$0xff]
        %v537 = vld [vmem:[%s289 + $0x6b8] sm:$0xff]
        %v538 = vld [vmem:[%s289 + $0x6c0] sm:$0xff]
        %v539 = vld [vmem:[%s289 + $0x6c8] sm:$0xff]
        %v540 = vld [vmem:[%s289 + $0x6d0] sm:$0xff]
        %v541 = vld [vmem:[%s289 + $0x6d8] sm:$0xff]
        %v542 = vld [vmem:[%s289 + $0x6e0] sm:$0xff]
        %v543 = vld [vmem:[%s289 + $0x6e8] sm:$0xff]
        %v544 = vld [vmem:[%s289 + $0x6f0] sm:$0xff]
        %v545 = vld [vmem:[%s289 + $0x6f8] sm:$0xff]
        %v546 = vld [vmem:[%s289 + $0x700] sm:$0xff]
        %v547 = vld [vmem:[%s289 + $0x708] sm:$0xff]
        %v548 = vld [vmem:[%s289 + $0x710] sm:$0xff]
        %v549 = vld [vmem:[%s289 + $0x718] sm:$0xff]
        %v550 = vld [vmem:[%s289 + $0x720] sm:$0xff]
        %v551 = vld [vmem:[%s289 + $0x728] sm:$0xff]
        %v552 = vld [vmem:[%s289 + $0x730] sm:$0xff]
        %v553 = vld [vmem:[%s289 + $0x738] sm:$0xff]
        %v554 = vld [vmem:[%s289 + $0x740] sm:$0xff]
        %v555 = vld [vmem:[%s289 + $0x748] sm:$0xff]
        %v556 = vld [vmem:[%s289 + $0x750] sm:$0xff]
        %v557 = vld [vmem:[%s289 + $0x758] sm:$0xff]
        %v558 = vld [vmem:[%s289 + $0x760] sm:$0xff]
        %v559 = vld [vmem:[%s289 + $0x768] sm:$0xff]
        %v560 = vld [vmem:[%s289 + $0x770] sm:$0xff]
        %v561 = vld [vmem:[%s289 + $0x778] sm:$0xff]
        %v562 = vld [vmem:[%s289 + $0x780] sm:$0xff]
        %v563 = vld [vmem:[%s289 + $0x788] sm:$0xff]
        %v564 = vld [vmem:[%s289 + $0x790] sm:$0xff]
        %v565 = vld [vmem:[%s289 + $0x798] sm:$0xff]
        %v566 = vld [vmem:[%s289 + $0x7a0] sm:$0xff]
        %v567 = vld [vmem:[%s289 + $0x7a8] sm:$0xff]
        %v568 = vld [vmem:[%s289 + $0x7b0] sm:$0xff]
        %v569 = vld [vmem:[%s289 + $0x7b8] sm:$0xff]
        %v570 = vld [vmem:[%s289 + $0x7c0] sm:$0xff]
        %v571 = vld [vmem:[%s289 + $0x7c8] sm:$0xff]
        %v572 = vld [vmem:[%s289 + $0x7d0] sm:$0xff]
        %v573 = vld [vmem:[%s289 + $0x7d8] sm:$0xff]
        %v574 = vld [vmem:[%s289 + $0x7e0] sm:$0xff]
        %v575 = vld [vmem:[%s289 + $0x7e8] sm:$0xff]
        %v576 = vld [vmem:[%s289 + $0x7f0] sm:$0xff]
        %v577 = vld [vmem:[%s289 + $0x7f8] sm:$0xff]
        %v578 = vld [vmem:[%s289 + $0x800] sm:$0xff]
        %v579 = vld [vmem:[%s289 + $0x808] sm:$0xff]
        %v580 = vld [vmem:[%s289 + $0x810] sm:$0xff]
        %v581 = vld [vmem:[%s289 + $0x818] sm:$0xff]
        %v582 = vld [vmem:[%s289 + $0x820] sm:$0xff]
        %v583 = vld [vmem:[%s289 + $0x828] sm:$0xff]
        %v584 = vld [vmem:[%s289 + $0x830] sm:$0xff]
        %v585 = vld [vmem:[%s289 + $0x838] sm:$0xff]
        %v586 = vld [vmem:[%s289 + $0x840] sm:$0xff]
        %v587 = vld [vmem:[%s289 + $0x848] sm:$0xff]
        %v588 = vld [vmem:[%s289 + $0x850] sm:$0xff]
        %v589 = vld [vmem:[%s289 + $0x858] sm:$0xff]
        %v590 = vld [vmem:[%s289 + $0x860] sm:$0xff]
        %v591 = vld [vmem:[%s289 + $0x868] sm:$0xff]
        %v592 = vld [vmem:[%s289 + $0x870] sm:$0xff]
        %v593 = vld [vmem:[%s289 + $0x878] sm:$0xff]
        %v594 = vld [vmem:[%s289 + $0x880] sm:$0xff]
        %v595 = vld [vmem:[%s289 + $0x888] sm:$0xff]
        %v596 = vld [vmem:[%s289 + $0x890] sm:$0xff]
        %v597 = vld [vmem:[%s289 + $0x898] sm:$0xff]
        %v598 = vld [vmem:[%s289 + $0x8a0] sm:$0xff]
        %v599 = vld [vmem:[%s289 + $0x8a8] sm:$0xff]
        %v600 = vld [vmem:[%s289 + $0x8b0] sm:$0xff]
        %v601 = vld [vmem:[%s289 + $0x8b8] sm:$0xff]
        %v602 = vld [vmem:[%s289 + $0x8c0] sm:$0xff]
        %v603 = vld [vmem:[%s289 + $0x8c8] sm:$0xff]
        %v604 = vld [vmem:[%s289 + $0x8d0] sm:$0xff]
        %v605 = vld [vmem:[%s289 + $0x8d8] sm:$0xff]
        %v606 = vld [vmem:[%s289 + $0x8e0] sm:$0xff]
        %v607 = vld [vmem:[%s289 + $0x8e8] sm:$0xff]
        %v608 = vld [vmem:[%s289 + $0x8f0] sm:$0xff]
        %v609 = vld [vmem:[%s289 + $0x8f8] sm:$0xff]
        %610 = vmatprep.subr.mxu0 %v323
        %611 = vmatpush1.msra.mxu0 %v322
        %612 = vmatprep.subr.mxu0 %v325
        %613 = vmatpush1.msra.mxu0 %v324
        %614 = vmatprep.subr.mxu0 %v327
        %615 = vmatpush1.msra.mxu0 %v326
        %616 = vmatprep.subr.mxu0 %v329
        %617 = vmatpush1.msra.mxu0 %v328
        %618 = vmatprep.subr.mxu0 %v331
        %619 = vmatpush1.msra.mxu0 %v330
        %620 = vmatprep.subr.mxu0 %v333
        %621 = vmatpush1.msra.mxu0 %v332
        %622 = vmatprep.subr.mxu0 %v335
        %623 = vmatpush1.msra.mxu0 %v334
        %624 = vmatprep.subr.mxu0 %v337
        %625 = vmatpush1.msra.mxu0 %v336
        %626 = vmatprep.subr.mxu0 %v339
        %627 = vmatpush1.msra.mxu0 %v338
        %628 = vmatprep.subr.mxu0 %v341
        %629 = vmatpush1.msra.mxu0 %v340
        %630 = vmatprep.subr.mxu0 %v343
        %631 = vmatpush1.msra.mxu0 %v342
        %632 = vmatprep.subr.mxu0 %v345
        %633 = vmatpush1.msra.mxu0 %v344
        %634 = vmatprep.subr.mxu0 %v347
        %635 = vmatpush1.msra.mxu0 %v346
        %636 = vmatprep.subr.mxu0 %v349
        %637 = vmatpush1.msra.mxu0 %v348
        %638 = vmatprep.subr.mxu0 %v351
        %639 = vmatpush1.msra.mxu0 %v350
        %640 = vmatprep.subr.mxu0 %v353
        %641 = vmatpush1.msra.mxu0 %v352
        %642 = vmatprep.subr.mxu0 %v355
        %643 = vmatpush1.msra.mxu0 %v354
        %644 = vmatprep.subr.mxu0 %v357
        %645 = vmatpush1.msra.mxu0 %v356
        %646 = vmatprep.subr.mxu0 %v359
        %647 = vmatpush1.msra.mxu0 %v358
        %648 = vmatprep.subr.mxu0 %v361
        %649 = vmatpush1.msra.mxu0 %v360
        %650 = vmatprep.subr.mxu0 %v363
        %651 = vmatpush1.msra.mxu0 %v362
        %652 = vmatprep.subr.mxu0 %v365
        %653 = vmatpush1.msra.mxu0 %v364
        %654 = vmatprep.subr.mxu0 %v367
        %655 = vmatpush1.msra.mxu0 %v366
        %656 = vmatprep.subr.mxu0 %v369
        %657 = vmatpush1.msra.mxu0 %v368
        %658 = vmatprep.subr.mxu0 %v371
        %659 = vmatpush1.msra.mxu0 %v370
        %660 = vmatprep.subr.mxu0 %v373
        %661 = vmatpush1.msra.mxu0 %v372
        %662 = vmatprep.subr.mxu0 %v375
        %663 = vmatpush1.msra.mxu0 %v374
        %664 = vmatprep.subr.mxu0 %v377
        %665 = vmatpush1.msra.mxu0 %v376
        %666 = vmatprep.subr.mxu0 %v379
        %667 = vmatpush1.msra.mxu0 %v378
        %668 = vmatprep.subr.mxu0 %v381
        %669 = vmatpush1.msra.mxu0 %v380
        %670 = vmatprep.subr.mxu0 %v383
        %671 = vmatpush1.msra.mxu0 %v382
        %672 = vmatprep.subr.mxu0 %v385
        %673 = vmatpush1.msra.mxu0 %v384
        %674 = vmatprep.mubr.f32.mxu0 %v305
        %675 = vmatmul.mubr.f32.gmra.mrb[0].mxu0 %v304
        %v676 = vpop.f32.mrb[0].mxu0
        %v677 = vadd.f32 0.0, %v676
        %v678 = vpop.f32.mrb[0].mxu0
        %v679 = vadd.f32 0.0, %v678
        %680 = vmatprep.mubr.f32.mxu0 %v314
        %681 = vmatmul.mubr.f32.gmra.mrb[0].mxu0 %v313
        %v682 = vpop.f32.mrb[0].mxu0
        %v683 = vadd.f32 0.0, %v682
        %v684 = vpop.f32.mrb[0].mxu0
        %v685 = vadd.f32 0.0, %v684
        %686 = vdwg.mxu0
        %687 = vmatprep.subr.mxu0 %v387
        %688 = vmatpush1.msra.mxu0 %v386
        %689 = vmatprep.subr.mxu0 %v389
        %690 = vmatpush1.msra.mxu0 %v388
        %691 = vmatprep.subr.mxu0 %v391
        %692 = vmatpush1.msra.mxu0 %v390
        %693 = vmatprep.subr.mxu0 %v393
        %694 = vmatpush1.msra.mxu0 %v392
        %695 = vmatprep.subr.mxu0 %v395
        %696 = vmatpush1.msra.mxu0 %v394
        %697 = vmatprep.subr.mxu0 %v397
        %698 = vmatpush1.msra.mxu0 %v396
        %699 = vmatprep.subr.mxu0 %v399
        %700 = vmatpush1.msra.mxu0 %v398
        %701 = vmatprep.subr.mxu0 %v401
        %702 = vmatpush1.msra.mxu0 %v400
        %703 = vmatprep.subr.mxu0 %v403
        %704 = vmatpush1.msra.mxu0 %v402
        %705 = vmatprep.subr.mxu0 %v405
        %706 = vmatpush1.msra.mxu0 %v404
        %707 = vmatprep.subr.mxu0 %v407
        %708 = vmatpush1.msra.mxu0 %v406
        %709 = vmatprep.subr.mxu0 %v409
        %710 = vmatpush1.msra.mxu0 %v408
        %711 = vmatprep.subr.mxu0 %v411
        %712 = vmatpush1.msra.mxu0 %v410
        %713 = vmatprep.subr.mxu0 %v413
        %714 = vmatpush1.msra.mxu0 %v412
        %715 = vmatprep.subr.mxu0 %v415
        %716 = vmatpush1.msra.mxu0 %v414
        %717 = vmatprep.subr.mxu0 %v417
        %718 = vmatpush1.msra.mxu0 %v416
        %719 = vmatprep.subr.mxu0 %v419
        %720 = vmatpush1.msra.mxu0 %v418
        %721 = vmatprep.subr.mxu0 %v421
        %722 = vmatpush1.msra.mxu0 %v420
        %723 = vmatprep.subr.mxu0 %v423
        %724 = vmatpush1.msra.mxu0 %v422
        %725 = vmatprep.subr.mxu0 %v425
        %726 = vmatpush1.msra.mxu0 %v424
        %727 = vmatprep.subr.mxu0 %v427
        %728 = vmatpush1.msra.mxu0 %v426
        %729 = vmatprep.subr.mxu0 %v429
        %730 = vmatpush1.msra.mxu0 %v428
        %731 = vmatprep.subr.mxu0 %v431
        %732 = vmatpush1.msra.mxu0 %v430
        %733 = vmatprep.subr.mxu0 %v433
        %734 = vmatpush1.msra.mxu0 %v432
        %735 = vmatprep.subr.mxu0 %v435
        %736 = vmatpush1.msra.mxu0 %v434
        %737 = vmatprep.subr.mxu0 %v437
        %738 = vmatpush1.msra.mxu0 %v436
        %739 = vmatprep.subr.mxu0 %v439
        %740 = vmatpush1.msra.mxu0 %v438
        %741 = vmatprep.subr.mxu0 %v441
        %742 = vmatpush1.msra.mxu0 %v440
        %743 = vmatprep.subr.mxu0 %v443
        %744 = vmatpush1.msra.mxu0 %v442
        %745 = vmatprep.subr.mxu0 %v445
        %746 = vmatpush1.msra.mxu0 %v444
        %747 = vmatprep.subr.mxu0 %v447
        %748 = vmatpush1.msra.mxu0 %v446
        %749 = vmatprep.subr.mxu0 %v449
        %750 = vmatpush1.msra.mxu0 %v448
        %751 = vmatprep.mubr.f32.mxu0 %v307
        %752 = vmatmul.mubr.f32.gmra.mrb[0].mxu0 %v306
        %v753 = vpop.f32.mrb[0].mxu0
        %v754 = vadd.f32 %v677, %v753
        %v755 = vpop.f32.mrb[0].mxu0
        %v756 = vadd.f32 %v679, %v755
        %757 = vmatprep.mubr.f32.mxu0 %v316
        %758 = vmatmul.mubr.f32.gmra.mrb[0].mxu0 %v315
        %v759 = vpop.f32.mrb[0].mxu0
        %v760 = vadd.f32 %v683, %v759
        %v761 = vpop.f32.mrb[0].mxu0
        %v762 = vadd.f32 %v685, %v761
        %763 = vdwg.mxu0
        %764 = vmatprep.subr.mxu0 %v451
        %765 = vmatpush1.msra.mxu0 %v450
        %766 = vmatprep.subr.mxu0 %v453
        %767 = vmatpush1.msra.mxu0 %v452
        %768 = vmatprep.subr.mxu0 %v455
        %769 = vmatpush1.msra.mxu0 %v454
        %770 = vmatprep.subr.mxu0 %v457
        %771 = vmatpush1.msra.mxu0 %v456
        %772 = vmatprep.subr.mxu0 %v459
        %773 = vmatpush1.msra.mxu0 %v458
        %774 = vmatprep.subr.mxu0 %v461
        %775 = vmatpush1.msra.mxu0 %v460
        %776 = vmatprep.subr.mxu0 %v463
        %777 = vmatpush1.msra.mxu0 %v462
        %778 = vmatprep.subr.mxu0 %v465
        %779 = vmatpush1.msra.mxu0 %v464
        %780 = vmatprep.subr.mxu0 %v467
        %781 = vmatpush1.msra.mxu0 %v466
        %782 = vmatprep.subr.mxu0 %v469
        %783 = vmatpush1.msra.mxu0 %v468
        %784 = vmatprep.subr.mxu0 %v471
        %785 = vmatpush1.msra.mxu0 %v470
        %786 = vmatprep.subr.mxu0 %v473
        %787 = vmatpush1.msra.mxu0 %v472
        %788 = vmatprep.subr.mxu0 %v475
        %789 = vmatpush1.msra.mxu0 %v474
        %790 = vmatprep.subr.mxu0 %v477
        %791 = vmatpush1.msra.mxu0 %v476
        %792 = vmatprep.subr.mxu0 %v479
        %793 = vmatpush1.msra.mxu0 %v478
        %794 = vmatprep.subr.mxu0 %v481
        %795 = vmatpush1.msra.mxu0 %v480
        %796 = vmatprep.subr.mxu0 %v483
        %797 = vmatpush1.msra.mxu0 %v482
        %798 = vmatprep.subr.mxu0 %v485
        %799 = vmatpush1.msra.mxu0 %v484
        %800 = vmatprep.subr.mxu0 %v487
        %801 = vmatpush1.msra.mxu0 %v486
        %802 = vmatprep.subr.mxu0 %v489
        %803 = vmatpush1.msra.mxu0 %v488
        %804 = vmatprep.subr.mxu0 %v491
        %805 = vmatpush1.msra.mxu0 %v490
        %806 = vmatprep.subr.mxu0 %v493
        %807 = vmatpush1.msra.mxu0 %v492
        %808 = vmatprep.subr.mxu0 %v495
        %809 = vmatpush1.msra.mxu0 %v494
        %810 = vmatprep.subr.mxu0 %v497
        %811 = vmatpush1.msra.mxu0 %v496
        %812 = vmatprep.subr.mxu0 %v499
        %813 = vmatpush1.msra.mxu0 %v498
        %814 = vmatprep.subr.mxu0 %v501
        %815 = vmatpush1.msra.mxu0 %v500
        %816 = vmatprep.subr.mxu0 %v503
        %817 = vmatpush1.msra.mxu0 %v502
        %818 = vmatprep.subr.mxu0 %v505
        %819 = vmatpush1.msra.mxu0 %v504
        %820 = vmatprep.subr.mxu0 %v507
        %821 = vmatpush1.msra.mxu0 %v506
        %822 = vmatprep.subr.mxu0 %v509
        %823 = vmatpush1.msra.mxu0 %v508
        %824 = vmatprep.subr.mxu0 %v511
        %825 = vmatpush1.msra.mxu0 %v510
        %826 = vmatprep.subr.mxu0 %v513
        %827 = vmatpush1.msra.mxu0 %v512
        %828 = vmatprep.mubr.f32.mxu0 %v309
        %829 = vmatmul.mubr.f32.gmra.mrb[0].mxu0 %v308
        %v830 = vpop.f32.mrb[0].mxu0
        %v831 = vadd.f32 %v754, %v830
        %v832 = vpop.f32.mrb[0].mxu0
        %v833 = vadd.f32 %v756, %v832
        %834 = vmatprep.mubr.f32.mxu0 %v318
        %835 = vmatmul.mubr.f32.gmra.mrb[0].mxu0 %v317
        %v836 = vpop.f32.mrb[0].mxu0
        %v837 = vadd.f32 %v760, %v836
        %v838 = vpop.f32.mrb[0].mxu0
        %v839 = vadd.f32 %v762, %v838
        %840 = vdwg.mxu0
        %841 = vmatprep.subr.mxu0 %v515
        %842 = vmatpush1.msra.mxu0 %v514
        %843 = vmatprep.subr.mxu0 %v517
        %844 = vmatpush1.msra.mxu0 %v516
        %845 = vmatprep.subr.mxu0 %v519
        %846 = vmatpush1.msra.mxu0 %v518
        %847 = vmatprep.subr.mxu0 %v521
        %848 = vmatpush1.msra.mxu0 %v520
        %849 = vmatprep.subr.mxu0 %v523
        %850 = vmatpush1.msra.mxu0 %v522
        %851 = vmatprep.subr.mxu0 %v525
        %852 = vmatpush1.msra.mxu0 %v524
        %853 = vmatprep.subr.mxu0 %v527
        %854 = vmatpush1.msra.mxu0 %v526
        %855 = vmatprep.subr.mxu0 %v529
        %856 = vmatpush1.msra.mxu0 %v528
        %857 = vmatprep.subr.mxu0 %v531
        %858 = vmatpush1.msra.mxu0 %v530
        %859 = vmatprep.subr.mxu0 %v533
        %860 = vmatpush1.msra.mxu0 %v532
        %861 = vmatprep.subr.mxu0 %v535
        %862 = vmatpush1.msra.mxu0 %v534
        %863 = vmatprep.subr.mxu0 %v537
        %864 = vmatpush1.msra.mxu0 %v536
        %865 = vmatprep.subr.mxu0 %v539
        %866 = vmatpush1.msra.mxu0 %v538
        %867 = vmatprep.subr.mxu0 %v541
        %868 = vmatpush1.msra.mxu0 %v540
        %869 = vmatprep.subr.mxu0 %v543
        %870 = vmatpush1.msra.mxu0 %v542
        %871 = vmatprep.subr.mxu0 %v545
        %872 = vmatpush1.msra.mxu0 %v544
        %873 = vmatprep.subr.mxu0 %v547
        %874 = vmatpush1.msra.mxu0 %v546
        %875 = vmatprep.subr.mxu0 %v549
        %876 = vmatpush1.msra.mxu0 %v548
        %877 = vmatprep.subr.mxu0 %v551
        %878 = vmatpush1.msra.mxu0 %v550
        %879 = vmatprep.subr.mxu0 %v553
        %880 = vmatpush1.msra.mxu0 %v552
        %881 = vmatprep.subr.mxu0 %v555
        %882 = vmatpush1.msra.mxu0 %v554
        %883 = vmatprep.subr.mxu0 %v557
        %884 = vmatpush1.msra.mxu0 %v556
        %885 = vmatprep.subr.mxu0 %v559
        %886 = vmatpush1.msra.mxu0 %v558
        %887 = vmatprep.subr.mxu0 %v561
        %888 = vmatpush1.msra.mxu0 %v560
        %889 = vmatprep.subr.mxu0 %v563
        %890 = vmatpush1.msra.mxu0 %v562
        %891 = vmatprep.subr.mxu0 %v565
        %892 = vmatpush1.msra.mxu0 %v564
        %893 = vmatprep.subr.mxu0 %v567
        %894 = vmatpush1.msra.mxu0 %v566
        %895 = vmatprep.subr.mxu0 %v569
        %896 = vmatpush1.msra.mxu0 %v568
        %897 = vmatprep.subr.mxu0 %v571
        %898 = vmatpush1.msra.mxu0 %v570
        %899 = vmatprep.subr.mxu0 %v573
        %900 = vmatpush1.msra.mxu0 %v572
        %901 = vmatprep.subr.mxu0 %v575
        %902 = vmatpush1.msra.mxu0 %v574
        %903 = vmatprep.subr.mxu0 %v577
        %904 = vmatpush1.msra.mxu0 %v576
        %905 = vmatprep.mubr.f32.mxu0 %v311
        %906 = vmatmul.mubr.f32.gmra.mrb[0].mxu0 %v310
        %v907 = vpop.f32.mrb[0].mxu0
        %v908 = vadd.f32 %v831, %v907
        %v909 = vpop.f32.mrb[0].mxu0
        %v910 = vadd.f32 %v833, %v909
        %911 = vmatprep.mubr.f32.mxu0 %v320
        %912 = vmatmul.mubr.f32.gmra.mrb[0].mxu0 %v319
        %v913 = vpop.f32.mrb[0].mxu0
        %v914 = vadd.f32 %v837, %v913
        %v915 = vpop.f32.mrb[0].mxu0
        %v916 = vadd.f32 %v839, %v915
        %917 = vdwg.mxu0
        %918 = vmatprep.subr.mxu0 %v579
        %919 = vmatpush1.msra.mxu0 %v578
        %920 = vmatprep.subr.mxu0 %v581
        %921 = vmatpush1.msra.mxu0 %v580
        %922 = vmatprep.subr.mxu0 %v583
        %923 = vmatpush1.msra.mxu0 %v582
        %924 = vmatprep.subr.mxu0 %v585
        %925 = vmatpush1.msra.mxu0 %v584
        %926 = vmatprep.subr.mxu0 %v587
        %927 = vmatpush1.msra.mxu0 %v586
        %928 = vmatprep.subr.mxu0 %v589
        %929 = vmatpush1.msra.mxu0 %v588
        %930 = vmatprep.subr.mxu0 %v591
        %931 = vmatpush1.msra.mxu0 %v590
        %932 = vmatprep.subr.mxu0 %v593
        %933 = vmatpush1.msra.mxu0 %v592
        %934 = vmatprep.subr.mxu0 %v595
        %935 = vmatpush1.msra.mxu0 %v594
        %936 = vmatprep.subr.mxu0 %v597
        %937 = vmatpush1.msra.mxu0 %v596
        %938 = vmatprep.subr.mxu0 %v599
        %939 = vmatpush1.msra.mxu0 %v598
        %940 = vmatprep.subr.mxu0 %v601
        %941 = vmatpush1.msra.mxu0 %v600
        %942 = vmatprep.subr.mxu0 %v603
        %943 = vmatpush1.msra.mxu0 %v602
        %944 = vmatprep.subr.mxu0 %v605
        %945 = vmatpush1.msra.mxu0 %v604
        %946 = vmatprep.subr.mxu0 %v607
        %947 = vmatpush1.msra.mxu0 %v606
        %948 = vmatprep.subr.mxu0 %v609
        %949 = vmatpush1.msra.mxu0 %v608
        %950 = vmatprep.subr.mxu0 0.0
        %951 = vmatpush1.msra.mxu0 0.0
        %952 = vmatprep.subr.mxu0 0.0
        %953 = vmatpush1.msra.mxu0 0.0
        %954 = vmatprep.subr.mxu0 0.0
        %955 = vmatpush1.msra.mxu0 0.0
        %956 = vmatprep.subr.mxu0 0.0
        %957 = vmatpush1.msra.mxu0 0.0
        %958 = vmatprep.subr.mxu0 0.0
        %959 = vmatpush1.msra.mxu0 0.0
        %960 = vmatprep.subr.mxu0 0.0
        %961 = vmatpush1.msra.mxu0 0.0
        %962 = vmatprep.subr.mxu0 0.0
        %963 = vmatpush1.msra.mxu0 0.0
        %964 = vmatprep.subr.mxu0 0.0
        %965 = vmatpush1.msra.mxu0 0.0
        %966 = vmatprep.subr.mxu0 0.0
        %967 = vmatpush1.msra.mxu0 0.0
        %968 = vmatprep.subr.mxu0 0.0
        %969 = vmatpush1.msra.mxu0 0.0
        %970 = vmatprep.subr.mxu0 0.0
        %971 = vmatpush1.msra.mxu0 0.0
        %972 = vmatprep.subr.mxu0 0.0
        %973 = vmatpush1.msra.mxu0 0.0
        %974 = vmatprep.subr.mxu0 0.0
        %975 = vmatpush1.msra.mxu0 0.0
        %976 = vmatprep.subr.mxu0 0.0
        %977 = vmatpush1.msra.mxu0 0.0
        %978 = vmatprep.subr.mxu0 0.0
        %979 = vmatpush1.msra.mxu0 0.0
        %980 = vmatprep.subr.mxu0 0.0
        %981 = vmatpush1.msra.mxu0 0.0
        %982 = vmatprep.mubr.f32.mxu0 0.0
        %983 = vmatmul.mubr.f32.gmra.mrb[0].mxu0 %v312
        %v984 = vpop.f32.mrb[0].mxu0
        %v985 = vadd.f32 %v908, %v984
        %v986 = vpop.f32.mrb[0].mxu0
        %v987 = vadd.f32 %v910, %v986
        %988 = vmatprep.mubr.f32.mxu0 0.0
        %989 = vmatmul.mubr.f32.gmra.mrb[0].mxu0 %v321
        %v990 = vpop.f32.mrb[0].mxu0
        %v991 = vadd.f32 %v914, %v990
        %v992 = vpop.f32.mrb[0].mxu0
        %v993 = vadd.f32 %v916, %v992
        %994 = vdwg.mxu0
        %v995 = vadd.f32 %v300, %v985
        %v996 = vadd.f32 %v301, %v987
        %v997 = vadd.f32 %v302, %v991
        %v998 = vadd.f32 %v303, %v993
        %999 = vst [vmem:[#allocation2] sm:$0xff] %v995
        %vm1000 = vcmask 588800
        %1001 = vst.msk [vmem:[#allocation2 + $0x8] sm:$0xff] %vm1000, %v996
        %1002 = vst [vmem:[#allocation2 + $0x10] sm:$0xff] %v997
        %1003 = vst.msk [vmem:[#allocation2 + $0x18] sm:$0xff] %vm1000, %v998
        %p1004 = scmp.eq.s32.totalorder %s17, 8
        // Predicated region
        $region68: #{tpu_custom_call.1} parent=58 // pred_check
          %p1005 = pneg %p1004
        $region69: #{tpu_custom_call.1} parent=58 // pred_check_branch
          %1007 = sbr.rel (%p1005) target = $region71
        $region70: #{tpu_custom_call.1} parent=58 // pred_region
          %v1008 = vld [vmem:[#allocation2] sm:$0xff]
          %v1009 = vld [vmem:[#allocation2 + $0x8] sm:$0xff]
          %v1010 = vld [vmem:[#allocation2 + $0x10] sm:$0xff]
          %v1011 = vld [vmem:[#allocation2 + $0x18] sm:$0xff]
          %v1012 = vld [vmem:[%s2] sm:$0x3]
          %v1014 = vlaneseq
          %v1015 = vshrl.u32 %v1014, 7
          %v1016 = vsub.s32 0, %v1015
          %v1017 = vrot.slane %v1012, %v1016
          %v1018 = vlaneseq
          %v1019 = vshrl.u32 %v1018, 7
          %v1020 = vsub.s32 1, %v1019
          %v1021 = vrot.slane %v1012, %v1020
          %v1024 = vadd.f32 %v1008, %v1017
          %v1025 = vadd.f32 %v1009, %v1021
          %v1026 = vadd.f32 %v1010, %v1017
          %v1027 = vadd.f32 %v1011, %v1021
          %v1028 = vld [vmem:[%s3] sm:$0x3]
          %v1030 = vlaneseq
          %v1031 = vshrl.u32 %v1030, 7
          %v1032 = vsub.s32 0, %v1031
          %v1033 = vrot.slane %v1028, %v1032
          %v1034 = vlaneseq
          %v1035 = vshrl.u32 %v1034, 7
          %v1036 = vsub.s32 1, %v1035
          %v1037 = vrot.slane %v1028, %v1036
          %v1040 = vmul.f32 %v1024, %v1033
          %v1041 = vmul.f32 %v1025, %v1037
          %v1042 = vmul.f32 %v1026, %v1033
          %v1043 = vmul.f32 %v1027, %v1037
          %v1044 = vld [vmem:[%s4] sm:$0x3]
          %v1046 = vlaneseq
          %v1047 = vshrl.u32 %v1046, 7
          %v1048 = vsub.s32 0, %v1047
          %v1049 = vrot.slane %v1044, %v1048
          %v1050 = vlaneseq
          %v1051 = vshrl.u32 %v1050, 7
          %v1052 = vsub.s32 1, %v1051
          %v1053 = vrot.slane %v1044, %v1052
          %v1056 = vadd.f32 %v1040, %v1049
          %v1057 = vadd.f32 %v1041, %v1053
          %v1058 = vadd.f32 %v1042, %v1049
          %v1059 = vadd.f32 %v1043, %v1053
          %v1060 = vmax.f32 %v1056, 0.0
          %v1061 = vmax.f32 %v1057, 0.0
          %v1062 = vmax.f32 %v1058, 0.0
          %v1063 = vmax.f32 %v1059, 0.0
          %1064 = vst [vmem:[#allocation4] sm:$0xff] %v1060
          %1065 = vst.msk [vmem:[#allocation4 + $0x8] sm:$0xff] %vm1000, %v1061
          %1066 = vst [vmem:[#allocation4 + $0x10] sm:$0xff] %v1062
          %1067 = vst.msk [vmem:[#allocation4 + $0x18] sm:$0xff] %vm1000, %v1063
        $region71: #{tpu_custom_call.1} parent=58 // pred_fallthru
          _
        // Predicated region
        $region72: #{tpu_custom_call.1} parent=58 // pred_check
          %p1068 = pneg %p145
        $region73: #{tpu_custom_call.1} parent=58 // pred_check_branch
          %1070 = sbr.rel (%p1068) target = $region75
        $region74: #{tpu_custom_call.1} parent=58 // pred_region
          %s1072 = ssub.s32 512, 512
          %1073 = vsyncadd [#allocation5], %s1072
          %s1074 = sshll.u32 [#allocation4], 4
          %s1075 = int_to_ptr.vmem [resolvable:$true] %s1074
          %1080 = dma.vmem_to_hbm [thread:$0]  %s1075, 512, %s5, [#allocation5], 256, 256, 16
        $region75: #{tpu_custom_call.1} parent=58 // pred_fallthru
          _
        // Predicated region
        $region76: #{tpu_custom_call.1} parent=58 // pred_check
          %p1081 = pneg %p145
        $region77: #{tpu_custom_call.1} parent=58 // pred_check_branch
          %1083 = sbr.rel (%p1081) target = $region79
        $region78: #{tpu_custom_call.1} parent=58 // pred_region
          %1084 = dma.done [#allocation5], 512
        $region79: #{tpu_custom_call.1} parent=58 // pred_fallthru
          _
      $region59: #{tpu_custom_call.1} parent=5 // pred_fallthru
        _
      %p1085 = scmp.le.s32.totalorder 2, %s12
      // Predicated region
      $region80: #{tpu_custom_call.1} parent=5 // pred_check
        %p1086 = pneg %p1085
      $region81: #{tpu_custom_call.1} parent=5 // pred_check_branch
        %1088 = sbr.rel (%p1086) target = $region83
      $region82: #{tpu_custom_call.1} parent=5 // pred_region
        %s1089 = ssub.s32 %s12, 2
      $region83: #{tpu_custom_call.1} parent=5 // pred_fallthru
        _
    $region6: #{tpu_custom_call.1} parent=1 // loop_footer
      %s16 = sadd.s32 1, %s12
    $region7: #{tpu_custom_call.1} parent=1 // loop_footer_branch
      %11 = sbr.rel target = $region3
    $region8: #{tpu_custom_call.1} parent=1 // loop_exit
      _
    %1090 = vsyncpa [#allocation5], 1
    %s1091 = scalar_lea.sflag [#allocation5], 1
    %1092 = vsyncpa %s1091, 1

</llo_original>
